<compile_context>
chip_gen: v5e
topology: v5e:2x2
jax: 0.10.0
libtpu: 0.0.40
codegen_flags: <defaults>
</compile_context>

<pallas_src>
import jax
import jax.numpy as jnp
from jax.experimental import pallas as pl
from jax.experimental.pallas import tpu as pltpu


def _round_up(n, m):
    return ((n + m - 1) // m) * m


# ----------------------------------------------------------------------------
# Kernel 1: row-tiled GEMM with fused bias (folded BatchNorm) + ReLU.
#   x: (tn, K) bf16, w: (K, Cp) bf16, b: (1, Cp) f32  ->  o: (tn, Cp) f32
# ----------------------------------------------------------------------------
def _matmul_bias_relu_kernel(x_ref, w_ref, b_ref, o_ref):
    acc = jnp.dot(x_ref[...], w_ref[...], preferred_element_type=jnp.float32)
    o_ref[...] = jnp.maximum(acc + b_ref[...], 0.0)


def matmul_bias_relu(x, w, b, *, tn=128):
    """x: (N, K) bf16, w: (K, Cp) bf16, b: (1, Cp) f32 -> (N, Cp) f32, ReLU'd.

    Rows are padded to a multiple of `tn`; the row axis is a "parallel" grid
    axis.  K and Cp are already padded to lane multiples by the caller.
    """
    N, K = x.shape
    Cp = w.shape[1]
    Np = _round_up(N, tn)
    if Np != N:
        x = jnp.pad(x, ((0, Np - N), (0, 0)))
    out = pl.pallas_call(
        _matmul_bias_relu_kernel,
        out_shape=jax.ShapeDtypeStruct((Np, Cp), jnp.float32),
        grid_spec=pltpu.PrefetchScalarGridSpec(
            num_scalar_prefetch=0,
            grid=(Np // tn,),
            in_specs=[
                pl.BlockSpec((tn, K), lambda i: (i, 0)),   # patch rows
                pl.BlockSpec((K, Cp), lambda i: (0, 0)),   # folded conv weight
                pl.BlockSpec((1, Cp), lambda i: (0, 0)),   # folded BN bias
            ],
            out_specs=pl.BlockSpec((tn, Cp), lambda i: (i, 0)),
        ),
        compiler_params=pltpu.CompilerParams(
            dimension_semantics=("parallel",)),
    )(x, w, b)
    return out[:N]


# ----------------------------------------------------------------------------
# Kernel 2: fused head = global average pool + fc + ReLU + Dropout(0.5).
#   x: (B, P, C) f32, w: (C, Ep) bf16, b: (1, Ep) f32, mask: (B, Ep) f32 {0, 2}
# ----------------------------------------------------------------------------
def _head_kernel(x_ref, w_ref, b_ref, m_ref, o_ref):
    pooled = jnp.mean(x_ref[...], axis=1)                        # (B, C) f32
    logits = jnp.dot(pooled.astype(jnp.bfloat16), w_ref[...],
                     preferred_element_type=jnp.float32) + b_ref[...]
    o_ref[...] = jnp.maximum(logits, 0.0) * m_ref[...]           # relu -> dropout


def head_pool_fc_relu_dropout(x_bpc, w, b, mask):
    B, P, C = x_bpc.shape
    Ep = w.shape[1]
    return pl.pallas_call(
        _head_kernel,
        out_shape=jax.ShapeDtypeStruct((B, Ep), jnp.float32),
        in_specs=[
            pl.BlockSpec((B, P, C), lambda: (0, 0, 0)),
            pl.BlockSpec((C, Ep), lambda: (0, 0)),
            pl.BlockSpec((1, Ep), lambda: (0, 0)),
            pl.BlockSpec((B, Ep), lambda: (0, 0)),
        ],
        out_specs=pl.BlockSpec((B, Ep), lambda: (0, 0)),
    )(x_bpc, w, b, mask)


# ----------------------------------------------------------------------------
# Glue: im2col for 3x3 stride-2 VALID conv (turns the conv into one big GEMM).
# ----------------------------------------------------------------------------
def im2col_3x3_s2(x_nhwc):
    B, H, W, C = x_nhwc.shape
    OH = (H - 3) // 2 + 1
    OW = (W - 3) // 2 + 1
    cols = []
    for kh in range(3):
        for kw in range(3):
            cols.append(x_nhwc[:, kh:kh + 2 * OH:2, kw:kw + 2 * OW:2, :])
    return jnp.concatenate(cols, axis=-1), OH, OW                # (B,OH,OW,9C)


# ----------------------------------------------------------------------------
# Synthetic parameters (deterministic). BatchNorm (eval mode) is folded into
# the conv weights/bias; all matmul operands are stored in bf16, padded to
# lane multiples of 128.
# ----------------------------------------------------------------------------
def init_params(key, embed_size, conv_channels=(32, 64), in_channels=3,
                bn_eps=1e-3):
    n_keys = 5 * len(conv_channels) + 2
    keys = jax.random.split(key, n_keys)
    convs = []
    cin = in_channels
    ki = 0
    for cout in conv_channels:
        kw_, kg, kb, km, kv = keys[ki:ki + 5]
        ki += 5
        w = jax.random.normal(kw_, (3, 3, cin, cout), jnp.float32)
        w = w / jnp.sqrt(9.0 * cin)
        gamma = 1.0 + 0.1 * jax.random.normal(kg, (cout,), jnp.float32)
        beta = 0.1 * jax.random.normal(kb, (cout,), jnp.float32)
        mean = 0.1 * jax.random.normal(km, (cout,), jnp.float32)
        var = 1.0 + 0.1 * jax.random.uniform(kv, (cout,), jnp.float32)
        s = gamma / jnp.sqrt(var + bn_eps)               # fold BN scale into W
        w_f = (w * s).reshape(9 * cin, cout)
        b_f = beta - mean * s
        Kp = _round_up(9 * cin, 128)
        Cp = _round_up(cout, 128)
        w_pad = jnp.zeros((Kp, Cp), jnp.float32)
        w_pad = w_pad.at[:9 * cin, :cout].set(w_f).astype(jnp.bfloat16)
        b_pad = jnp.zeros((1, Cp), jnp.float32).at[0, :cout].set(b_f)
        convs.append({"w": w_pad, "b": b_pad, "cout": cout})
        cin = cout

    k_fw, k_fb = keys[ki:ki + 2]
    c_feat = cin
    ep = _round_up(embed_size, 128)
    fc_w = jax.random.normal(k_fw, (c_feat, embed_size), jnp.float32)
    fc_w = fc_w / jnp.sqrt(float(c_feat))
    fc_b = 0.1 * jax.random.normal(k_fb, (embed_size,), jnp.float32)
    fc_w_pad = jnp.zeros((c_feat, ep), jnp.float32)
    fc_w_pad = fc_w_pad.at[:, :embed_size].set(fc_w).astype(jnp.bfloat16)
    fc_b_pad = jnp.zeros((1, ep), jnp.float32).at[0, :embed_size].set(fc_b)
    return {"convs": convs, "fc_w": fc_w_pad, "fc_b": fc_b_pad,
            "embed_size": embed_size}


# ----------------------------------------------------------------------------
# Forward: images (B,3,H,W) -> backbone stem (Pallas conv-GEMMs) -> fused
# pool + fc + ReLU + Dropout(0.5) head (Pallas) -> (B, embed_size).
# ----------------------------------------------------------------------------
def encoder_cnn_forward(params, images, dropout_mask):
    x = jnp.transpose(images, (0, 2, 3, 1))                      # NHWC
    for layer in params["convs"]:
        patches, oh, ow = im2col_3x3_s2(x)
        b = patches.shape[0]
        k = patches.shape[-1]
        flat = patches.reshape(b * oh * ow, k)
        kp = layer["w"].shape[0]
        if kp != k:
            flat = jnp.pad(flat, ((0, 0), (0, kp - k)))
        flat = flat.astype(jnp.bfloat16)
        y = matmul_bias_relu(flat, layer["w"], layer["b"])       # (N, Cp) f32
        cout = layer["cout"]
        x = y[:, :cout].reshape(b, oh, ow, cout)
    b, oh, ow, c = x.shape
    feat = x.reshape(b, oh * ow, c)
    out = head_pool_fc_relu_dropout(feat, params["fc_w"], params["fc_b"],
                                    dropout_mask)
    return out[:, :params["embed_size"]]


# ----------------------------------------------------------------------------
# Pure-JAX reference (same folded weights / bf16 casts) for a sanity check.
# ----------------------------------------------------------------------------
def ref_forward(params, images, dropout_mask):
    x = jnp.transpose(images, (0, 2, 3, 1))
    for layer in params["convs"]:
        patches, oh, ow = im2col_3x3_s2(x)
        b = patches.shape[0]
        k = patches.shape[-1]
        flat = patches.reshape(b * oh * ow, k)
        kp = layer["w"].shape[0]
        if kp != k:
            flat = jnp.pad(flat, ((0, 0), (0, kp - k)))
        y = jnp.dot(flat.astype(jnp.bfloat16), layer["w"],
                    preferred_element_type=jnp.float32) + layer["b"]
        y = jnp.maximum(y, 0.0)
        cout = layer["cout"]
        x = y[:, :cout].reshape(b, oh, ow, cout)
    pooled = jnp.mean(x, axis=(1, 2))
    logits = jnp.dot(pooled.astype(jnp.bfloat16), params["fc_w"],
                     preferred_element_type=jnp.float32) + params["fc_b"]
    out = jnp.maximum(logits, 0.0) * dropout_mask
    return out[:, :params["embed_size"]]


if __name__ == "__main__":
    embed_size = 32
    B, Cin, H, W = 2, 3, 32, 32

    key = jax.random.PRNGKey(0)
    k_param, k_img, k_drop = jax.random.split(key, 3)
    params = init_params(k_param, embed_size)
    images = jax.random.normal(k_img, (B, Cin, H, W), jnp.float32)

    # Dropout(p=0.5): deterministic keep mask with 1/(1-p)=2x scaling, padded
    # to the lane-dense width used inside the head kernel.
    ep = _round_up(embed_size, 128)
    keep = jax.random.bernoulli(k_drop, 0.5, (B, ep))
    dropout_mask = jnp.where(keep, 2.0, 0.0).astype(jnp.float32)

    out = encoder_cnn_forward(params, images, dropout_mask)
    out = jax.block_until_ready(out)

    ref = ref_forward(params, images, dropout_mask)

    assert out.shape == (B, embed_size)
    assert bool(jnp.all(jnp.isfinite(out)))
    assert jnp.allclose(out, ref, atol=1e-2, rtol=1e-2), \
        float(jnp.max(jnp.abs(out - ref)))
    # Dropout really zeroes the dropped positions.
    assert bool(jnp.all(jnp.where(dropout_mask[:, :embed_size] == 0.0,
                                  out == 0.0, True)))

    print("KERNEL_OK")
</pallas_src>

<mosaic_0001>
module attributes {stable_mosaic.version = 11 : i64} {
  func.func @_matmul_bias_relu_kernel(%arg0: i32, %arg1: memref<128x128xbf16, #tpu.memory_space<vmem>>, %arg2: memref<128x128xbf16, #tpu.memory_space<vmem>>, %arg3: memref<1x128xf32, #tpu.memory_space<vmem>>, %arg4: memref<128x128xf32, #tpu.memory_space<vmem>>) attributes {dimension_semantics = [#tpu.dimension_semantics<parallel>], iteration_bounds = array<i64: 4>, scalar_prefetch = 0 : i64, scratch_operands = 0 : i64, tpu.core_type = #tpu.core_type<tc>, window_params = [{transform_indices = @transform_0, window_bounds = array<i64: 128, 128>}, {pipeline_mode = #tpu.pipeline_mode<synchronous>, transform_indices = @transform_1, window_bounds = array<i64: 128, 128>}, {pipeline_mode = #tpu.pipeline_mode<synchronous>, transform_indices = @transform_2, window_bounds = array<i64: 1, 128>}, {transform_indices = @transform_3, window_bounds = array<i64: 128, 128>}]} {
    %c0 = arith.constant 0 : index
    %c0_0 = arith.constant 0 : index
    %0 = vector.load %arg1[%c0, %c0_0] : memref<128x128xbf16, #tpu.memory_space<vmem>>, vector<128x128xbf16>
    %c0_1 = arith.constant 0 : index
    %c0_2 = arith.constant 0 : index
    %1 = vector.load %arg2[%c0_1, %c0_2] : memref<128x128xbf16, #tpu.memory_space<vmem>>, vector<128x128xbf16>
    %cst = arith.constant dense<0.000000e+00> : vector<128x128xf32>
    %2 = tpu.matmul %0, %1, %cst {dimension_numbers = #tpu.dot_dimension_numbers<[1], [0], [0], [1], [0, 0, 1, 1], [], []>} : vector<128x128xbf16>, vector<128x128xbf16>, vector<128x128xf32> -> vector<128x128xf32>
    %c0_3 = arith.constant 0 : index
    %c0_4 = arith.constant 0 : index
    %3 = vector.load %arg3[%c0_3, %c0_4] : memref<1x128xf32, #tpu.memory_space<vmem>>, vector<1x128xf32>
    %4 = vector.broadcast %3 : vector<1x128xf32> to vector<128x128xf32>
    %5 = arith.addf %2, %4 : vector<128x128xf32>
    %cst_5 = arith.constant 0.000000e+00 : f32
    %6 = vector.broadcast %cst_5 : f32 to vector<128x128xf32>
    %7 = arith.maximumf %5, %6 : vector<128x128xf32>
    %c0_6 = arith.constant 0 : index
    %c0_7 = arith.constant 0 : index
    %8 = vector.load %arg4[%c0_6, %c0_7] : memref<128x128xf32, #tpu.memory_space<vmem>>, vector<128x128xf32>
    tpu.vector_store %arg4[%c0_6, %c0_7], %7 {strides = array<i32>} : memref<128x128xf32, #tpu.memory_space<vmem>>, vector<128x128xf32>,
    return
  }
  func.func @transform_0(%arg0: i32) -> (i32, i32) {
    %c0_i32 = arith.constant 0 : i32
    %c0_i32_0 = arith.constant 0 : i32
    return %arg0, %c0_i32 : i32, i32
  }
  func.func @transform_1(%arg0: i32) -> (i32, i32) {
    %c0_i32 = arith.constant 0 : i32
    %c0_i32_0 = arith.constant 0 : i32
    %c0_i32_1 = arith.constant 0 : i32
    return %c0_i32, %c0_i32_0 : i32, i32
  }
  func.func @transform_2(%arg0: i32) -> (i32, i32) {
    %c0_i32 = arith.constant 0 : i32
    %c0_i32_0 = arith.constant 0 : i32
    %c0_i32_1 = arith.constant 0 : i32
    return %c0_i32, %c0_i32_0 : i32, i32
  }
  func.func @transform_3(%arg0: i32) -> (i32, i32) {
    %c0_i32 = arith.constant 0 : i32
    %c0_i32_0 = arith.constant 0 : i32
    return %arg0, %c0_i32 : i32, i32
  }
}

</mosaic_0001>

<llo_original>
// kernel: tpu_custom_call.1
$region0: #{tpu_custom_call.1}
  #allocation0 [shape = 'u32[]', space=smem, size = 0x4, offset = 0x4, fixed_abs, tag = 'smem constant byte address 0x4 - core index']
  #allocation1 [shape = 'u32[72,128]{1,0:T(1,128)}', space=vmem, size = 0x9000, scoped, tag = 'internal scratch']
  %s0 = inlined_call_operand.hbm [shape: bf16[512,128], index: 0, kind: input, shape index: {}]
  %s1 = inlined_call_operand.hbm [shape: bf16[128,128], index: 1, kind: input, shape index: {}]
  %s2 = inlined_call_operand.vmem [shape: f32[1,128], index: 2, kind: input, shape index: {}]
  %s3 = inlined_call_operand.hbm [shape: f32[512,128], index: 3, kind: output, shape index: {}]
  %s4 = sld [smem:[#allocation0]]
  $region53: #{tpu_custom_call.1} parent=0
    _
  %s6 = ssub.s32 1, %s4
  %s7 = scalar_select 0, %s6, %s4
  $region1: #{tpu_custom_call.1} parent=0
    #allocation2 [shape = 'u8[65536]{0}', space=vmem, size = 0x10000, scoped, tag = 'input window, operand 0']
    #allocation3 [shape = 's32[2]{0}', space=sflag, size = 0x8, scoped, tag = 'scoped memory for tpu_custom_call.1']
    #allocation4 [shape = 's32[2]{0}', space=sflag, size = 0x8, scoped, tag = 'scoped memory for tpu_custom_call.1']
    #allocation5 [shape = 'u8[32768]{0}', space=vmem, size = 0x8000, scoped, tag = 'input window, operand 1, single buffered']
    #allocation6 [shape = 's32[1]{0}', space=sflag, size = 0x4, scoped, tag = 'scoped memory for tpu_custom_call.1']
    #allocation7 [shape = 'u8[131072]{0}', space=vmem, size = 0x20000, scoped, tag = 'output window, operand 0']
    %8 = vsyncpa [#allocation3], 0
    %s9 = scalar_lea.sflag [#allocation3], 1
    %10 = vsyncpa %s9, 0
    %11 = vsyncpa [#allocation6], 0
    %12 = vsyncpa [#allocation4], 0
    %s13 = scalar_lea.sflag [#allocation4], 1
    %14 = vsyncpa %s13, 0
    loop: start=0, step=1, limit=6
    $region2: #{tpu_custom_call.1} parent=1 // loop_pre_header
      _
    $region3: #{tpu_custom_call.1} parent=1 // loop_header
      %s16 = sphi 0, %s20
      %p17 = scmp.ge.s32.totalorder %s16, 6
      %s26 = sphi 0, %s28
      %s29 = sphi 0, %s26
      %s30 = sphi 0, %s29
      %s46 = sphi 0, %s30
      %s50 = sphi 0, %s50
      %s52 = sphi 0, %s50
      %s53 = sphi 0, %s52
      %s67 = sphi 0, %s53
      %s71 = sphi 0, %s71
      %s73 = sphi 0, %s71
      %s74 = sphi 0, %s73
      %s88 = sphi 0, %s74
      %s94 = sphi 0, %s96
      %s97 = sphi 0, %s94
      %s98 = sphi 0, %s97
      %s114 = sphi 0, %s98
    $region4: #{tpu_custom_call.1} parent=1 // loop_header_branch
      %19 = sbr.rel (%p17) target = $region8
    $region5: #{tpu_custom_call.1} parent=1 // loop_body
      %s21 = ssub.s32 %s16, 1
      %s22 = ssub.s32 %s16, 2
      %s23 = sadd.s32 %s16, 1
      %s24 = ssub.s32 %s16, %s23
      %p25 = scmp.eq.s32.totalorder %s24, 0
      %s27 = sadd.s32 %s26, 1
      %s28 = scalar_select %p25, %s26, %s27
      %p31 = pneg %p25
      %p32 = scmp.eq.s32.totalorder %s16, 3
      %p33 = por %p31, %p32
      %p34 = scmp.ne.s32.totalorder %s26, %s29
      %p35 = scmp.eq.s32.totalorder %s16, 0
      %p36 = por %p34, %p35
      %p37 = scmp.ne.s32.totalorder %s26, %s29
      %p38 = scmp.eq.s32.totalorder %s21, 3
      %p39 = por %p37, %p38
      %p40 = scmp.ne.s32.totalorder %s29, %s30
      %p41 = scmp.eq.s32.totalorder %s21, 0
      %p42 = por %p40, %p41
      %p43 = scmp.ne.s32.totalorder %s29, %s30
      %p44 = scmp.eq.s32.totalorder %s22, 3
      %p45 = por %p43, %p44
      %p47 = scmp.ne.s32.totalorder %s30, %s46
      %p48 = scmp.eq.s32.totalorder %s22, 0
      %p49 = por %p47, %p48
      %s51 = sadd.s32 %s50, 1
      %p54 = scmp.eq.s32.totalorder %s16, 3
      %p55 = scmp.ne.s32.totalorder %s50, %s52
      %p56 = scmp.eq.s32.totalorder %s16, 0
      %p57 = por %p55, %p56
      %p58 = scmp.ne.s32.totalorder %s50, %s52
      %p59 = scmp.eq.s32.totalorder %s21, 3
      %p60 = por %p58, %p59
      %p61 = scmp.ne.s32.totalorder %s52, %s53
      %p62 = scmp.eq.s32.totalorder %s21, 0
      %p63 = por %p61, %p62
      %p64 = scmp.ne.s32.totalorder %s52, %s53
      %p65 = scmp.eq.s32.totalorder %s22, 3
      %p66 = por %p64, %p65
      %p68 = scmp.ne.s32.totalorder %s53, %s67
      %p69 = scmp.eq.s32.totalorder %s22, 0
      %p70 = por %p68, %p69
      %s72 = sadd.s32 %s71, 1
      %p75 = scmp.eq.s32.totalorder %s16, 3
      %p76 = scmp.ne.s32.totalorder %s71, %s73
      %p77 = scmp.eq.s32.totalorder %s16, 0
      %p78 = por %p76, %p77
      %p79 = scmp.ne.s32.totalorder %s71, %s73
      %p80 = scmp.eq.s32.totalorder %s21, 3
      %p81 = por %p79, %p80
      %p82 = scmp.ne.s32.totalorder %s73, %s74
      %p83 = scmp.eq.s32.totalorder %s21, 0
      %p84 = por %p82, %p83
      %p85 = scmp.ne.s32.totalorder %s73, %s74
      %p86 = scmp.eq.s32.totalorder %s22, 3
      %p87 = por %p85, %p86
      %p89 = scmp.ne.s32.totalorder %s74, %s88
      %p90 = scmp.eq.s32.totalorder %s22, 0
      %p91 = por %p89, %p90
      %s92 = ssub.s32 %s16, %s23
      %p93 = scmp.eq.s32.totalorder %s92, 0
      %s95 = sadd.s32 %s94, 1
      %s96 = scalar_select %p93, %s94, %s95
      %p99 = pneg %p93
      %p100 = scmp.eq.s32.totalorder %s16, 3
      %p101 = por %p99, %p100
      %p102 = scmp.ne.s32.totalorder %s94, %s97
      %p103 = scmp.eq.s32.totalorder %s16, 0
      %p104 = por %p102, %p103
      %p105 = scmp.ne.s32.totalorder %s94, %s97
      %p106 = scmp.eq.s32.totalorder %s21, 3
      %p107 = por %p105, %p106
      %p108 = scmp.ne.s32.totalorder %s97, %s98
      %p109 = scmp.eq.s32.totalorder %s21, 0
      %p110 = por %p108, %p109
      %p111 = scmp.ne.s32.totalorder %s97, %s98
      %p112 = scmp.eq.s32.totalorder %s22, 3
      %p113 = por %p111, %p112
      %p115 = scmp.ne.s32.totalorder %s98, %s114
      %p116 = scmp.eq.s32.totalorder %s22, 0
      %p117 = por %p115, %p116
      %p118 = scmp.le.s32.totalorder 1, %s16
      %p119 = scmp.lt.s32.totalorder %s16, 5
      %p120 = pnand %p118, %p119
      %p121 = pneg %p120
      // Predicated region
      $region9: #{tpu_custom_call.1} parent=5 // pred_check
        _
      $region10: #{tpu_custom_call.1} parent=5 // pred_check_branch
        %123 = sbr.rel (%p120) target = $region12
      $region11: #{tpu_custom_call.1} parent=5 // pred_region
        %s124 = ssub.s32 %s16, 1
        // Predicated region
        $region13: #{tpu_custom_call.1} parent=11 // pred_check
          %p125 = pneg %p63
        $region14: #{tpu_custom_call.1} parent=11 // pred_check_branch
          %127 = sbr.rel (%p125) target = $region16
        $region15: #{tpu_custom_call.1} parent=11 // pred_region
          %129 = vsyncadd [#allocation6], 0
          %s130 = sshll.u32 %s1, 4
          %s131 = int_to_ptr.hbm [resolvable:$true] %s130
          %s132 = sshll.u32 [#allocation5], 4
          %s133 = int_to_ptr.vmem [resolvable:$true] %s132
          %138 = dma.hbm_to_vmem [thread:$0]  %s131, 1024, %s133, [#allocation6], 64, 64, 4
        $region16: #{tpu_custom_call.1} parent=11 // pred_fallthru
          _
        // Predicated region
        $region17: #{tpu_custom_call.1} parent=11 // pred_check
          %p139 = pneg %p84
        $region18: #{tpu_custom_call.1} parent=11 // pred_check_branch
          %141 = sbr.rel (%p139) target = $region20
        $region19: #{tpu_custom_call.1} parent=11 // pred_region
          _
        $region20: #{tpu_custom_call.1} parent=11 // pred_fallthru
          _
      $region12: #{tpu_custom_call.1} parent=5 // pred_fallthru
        _
      %p142 = scmp.lt.s32.totalorder %s16, 4
      // Predicated region
      $region21: #{tpu_custom_call.1} parent=5 // pred_check
        %p143 = pneg %p142
      $region22: #{tpu_custom_call.1} parent=5 // pred_check_branch
        %145 = sbr.rel (%p143) target = $region24
      $region23: #{tpu_custom_call.1} parent=5 // pred_region
        // Predicated region
        $region25: #{tpu_custom_call.1} parent=23 // pred_check
          %p146 = pneg %p36
        $region26: #{tpu_custom_call.1} parent=23 // pred_check_branch
          %148 = sbr.rel (%p146) target = $region28
        $region27: #{tpu_custom_call.1} parent=23 // pred_region
          %s149 = sand.u32 %s26, 1
          %s150 = scalar_lea.sflag [#allocation3], %s149
          %s151 = sand.u32 %s26, 1
          %s152 = smul.addr %s151, 64
          %s153 = scalar_lea.vmem [#allocation2], %s152
          %s154 = smul.u32 16, %s16
          %156 = vsyncadd %s150, 0
          %s157 = smul.addr %s154, 4
          %s158 = scalar_lea.hbm %s0, %s157
          %s159 = sshll.u32 %s158, 4
          %s160 = int_to_ptr.hbm [resolvable:$true] %s159
          %s161 = sshll.u32 %s153, 4
          %s162 = int_to_ptr.vmem [resolvable:$true] %s161
          %167 = dma.hbm_to_vmem [thread:$0]  %s160, 1024, %s162, %s150, 64, 64, 4
        $region28: #{tpu_custom_call.1} parent=23 // pred_fallthru
          _
      $region24: #{tpu_custom_call.1} parent=5 // pred_fallthru
        _
      %p168 = scmp.le.s32.totalorder 1, %s16
      %p169 = scmp.lt.s32.totalorder %s16, 5
      %p170 = pnand %p168, %p169
      %p171 = pneg %p170
      // Predicated region
      $region29: #{tpu_custom_call.1} parent=5 // pred_check
        _
      $region30: #{tpu_custom_call.1} parent=5 // pred_check_branch
        %173 = sbr.rel (%p170) target = $region32
      $region31: #{tpu_custom_call.1} parent=5 // pred_region
        %s174 = ssub.s32 %s16, 1
        %s175 = sand.u32 %s29, 1
        %s176 = scalar_lea.sflag [#allocation3], %s175
        %s177 = sand.u32 %s29, 1
        %s178 = smul.addr %s177, 64
        %s179 = scalar_lea.vmem [#allocation2], %s178
        // Predicated region
        $region33: #{tpu_custom_call.1} parent=31 // pred_check
          %p180 = pneg %p42
        $region34: #{tpu_custom_call.1} parent=31 // pred_check_branch
          %182 = sbr.rel (%p180) target = $region36
        $region35: #{tpu_custom_call.1} parent=31 // pred_region
          %184 = dma.done %s176, 1024
        $region36: #{tpu_custom_call.1} parent=31 // pred_fallthru
          _
        // Predicated region
        $region37: #{tpu_custom_call.1} parent=31 // pred_check
          %p185 = pneg %p63
        $region38: #{tpu_custom_call.1} parent=31 // pred_check_branch
          %187 = sbr.rel (%p185) target = $region40
        $region39: #{tpu_custom_call.1} parent=31 // pred_region
          %189 = dma.done [#allocation6], 1024
        $region40: #{tpu_custom_call.1} parent=31 // pred_fallthru
          _
        %s190 = sand.u32 %s29, 1
        %s191 = scalar_lea.sflag [#allocation3], %s190
        %s192 = sand.u32 %s29, 1
        %s193 = smul.addr %s192, 64
        %s194 = scalar_lea.vmem [#allocation2], %s193
        %p195 = pneg %p42
        %p196 = pneg %p39
        %p197 = pneg %p63
        %p198 = pneg %p60
        %p199 = pneg %p84
        %p200 = pneg %p81
        %p201 = pneg %p110
        %p202 = pneg %p107
        %s203 = sand.u32 %s97, 1
        %s204 = scalar_lea.sflag [#allocation4], %s203
        %s205 = sand.u32 %s97, 1
        %s206 = smul.addr %s205, 128
        %s207 = scalar_lea.vmem [#allocation7], %s206
        %s208 = smul.u32 16, %s21
        %s209 = smul.u32 16, %s21
        %v210 = vld [vmem:[%s179] sm:$0xf]
        %v211 = vld [vmem:[%s179 + $0x4] sm:$0xf]
        %v212 = vld [vmem:[%s179 + $0x8] sm:$0xf]
        %v213 = vld [vmem:[%s179 + $0xc] sm:$0xf]
        %v214 = vld [vmem:[%s179 + $0x10] sm:$0xf]
        %v215 = vld [vmem:[%s179 + $0x14] sm:$0xf]
        %v216 = vld [vmem:[%s179 + $0x18] sm:$0xf]
        %v217 = vld [vmem:[%s179 + $0x1c] sm:$0xf]
        %v218 = vld [vmem:[%s179 + $0x20] sm:$0xf]
        %v219 = vld [vmem:[%s179 + $0x24] sm:$0xf]
        %v220 = vld [vmem:[%s179 + $0x28] sm:$0xf]
        %v221 = vld [vmem:[%s179 + $0x2c] sm:$0xf]
        %v222 = vld [vmem:[%s179 + $0x30] sm:$0xf]
        %v223 = vld [vmem:[%s179 + $0x34] sm:$0xf]
        %v224 = vld [vmem:[%s179 + $0x38] sm:$0xf]
        %v225 = vld [vmem:[%s179 + $0x3c] sm:$0xf]
        %v226 = vld [vmem:[#allocation5] sm:$0xf]
        %v227 = vld [vmem:[#allocation5 + $0x4] sm:$0xf]
        %v228 = vld [vmem:[#allocation5 + $0x8] sm:$0xf]
        %v229 = vld [vmem:[#allocation5 + $0xc] sm:$0xf]
        %v230 = vld [vmem:[#allocation5 + $0x10] sm:$0xf]
        %v231 = vld [vmem:[#allocation5 + $0x14] sm:$0xf]
        %v232 = vld [vmem:[#allocation5 + $0x18] sm:$0xf]
        %v233 = vld [vmem:[#allocation5 + $0x1c] sm:$0xf]
        %v234 = vld [vmem:[#allocation5 + $0x20] sm:$0xf]
        %v235 = vld [vmem:[#allocation5 + $0x24] sm:$0xf]
        %v236 = vld [vmem:[#allocation5 + $0x28] sm:$0xf]
        %v237 = vld [vmem:[#allocation5 + $0x2c] sm:$0xf]
        %v238 = vld [vmem:[#allocation5 + $0x30] sm:$0xf]
        %v239 = vld [vmem:[#allocation5 + $0x34] sm:$0xf]
        %v240 = vld [vmem:[#allocation5 + $0x38] sm:$0xf]
        %v241 = vld [vmem:[#allocation5 + $0x3c] sm:$0xf]
        %v242 = vld [vmem:[%s2] sm:$0x1]
        %v244 = vperm.slane %v242, 0
        %v262 = vunpack.c.l.b16 %v210
        %v263 = vunpack.c.l.b16 %v211
        %v264 = vunpack.c.l.b16 %v212
        %v265 = vunpack.c.l.b16 %v213
        %v266 = vunpack.c.l.b16 %v214
        %v267 = vunpack.c.l.b16 %v215
        %v268 = vunpack.c.l.b16 %v216
        %v269 = vunpack.c.l.b16 %v217
        %v270 = vunpack.c.l.b16 %v218
        %v271 = vunpack.c.l.b16 %v219
        %v272 = vunpack.c.l.b16 %v220
        %v273 = vunpack.c.l.b16 %v221
        %v274 = vunpack.c.l.b16 %v222
        %v275 = vunpack.c.l.b16 %v223
        %v276 = vunpack.c.l.b16 %v224
        %v277 = vunpack.c.l.b16 %v225
        %v278 = vpack.c.b16 %v263, %v262
        %v279 = vpack.c.b16 %v265, %v264
        %v280 = vpack.c.b16 %v267, %v266
        %v281 = vpack.c.b16 %v269, %v268
        %v282 = vpack.c.b16 %v271, %v270
        %v283 = vpack.c.b16 %v273, %v272
        %v284 = vpack.c.b16 %v275, %v274
        %v285 = vpack.c.b16 %v277, %v276
        %v310 = vunpack.c.l.b16 %v226
        %v311 = vunpack.c.l.b16 %v227
        %v312 = vunpack.c.l.b16 %v228
        %v313 = vunpack.c.l.b16 %v229
        %v314 = vunpack.c.l.b16 %v230
        %v315 = vunpack.c.l.b16 %v231
        %v316 = vunpack.c.l.b16 %v232
        %v317 = vunpack.c.l.b16 %v233
        %v318 = vunpack.c.l.b16 %v234
        %v319 = vunpack.c.l.b16 %v235
        %v320 = vunpack.c.l.b16 %v236
        %v321 = vunpack.c.l.b16 %v237
        %v322 = vunpack.c.l.b16 %v238
        %v323 = vunpack.c.l.b16 %v239
        %v324 = vunpack.c.l.b16 %v240
        %v325 = vunpack.c.l.b16 %v241
        %v326 = vpack.c.b16 %v311, %v310
        %v327 = vpack.c.b16 %v313, %v312
        %v328 = vpack.c.b16 %v315, %v314
        %v329 = vpack.c.b16 %v317, %v316
        %v330 = vpack.c.b16 %v319, %v318
        %v331 = vpack.c.b16 %v321, %v320
        %v332 = vpack.c.b16 %v323, %v322
        %v333 = vpack.c.b16 %v325, %v324
        %342 = vmatpush.bf16.msra.mxu0 %v333
        %343 = vmatpush.bf16.msra.mxu0 %v332
        %344 = vmatpush.bf16.msra.mxu0 %v331
        %345 = vmatpush.bf16.msra.mxu0 %v330
        %346 = vmatpush.bf16.msra.mxu0 %v329
        %347 = vmatpush.bf16.msra.mxu0 %v328
        %348 = vmatpush.bf16.msra.mxu0 %v327
        %349 = vmatpush.bf16.msra.mxu0 %v326
        %350 = vmatmul.bf16.gmra.mxu0 %v278
        %v351 = vpop.f32.mrf.mxu0
        %v352 = vadd.f32 %v244, %v351
        %v353 = vpop.f32.mrf.mxu0
        %v354 = vadd.f32 %v244, %v353
        %355 = vmatmul.bf16.gmra.mxu0 %v279
        %v356 = vpop.f32.mrf.mxu0
        %v357 = vadd.f32 %v244, %v356
        %v358 = vpop.f32.mrf.mxu0
        %v359 = vadd.f32 %v244, %v358
        %360 = vmatmul.bf16.gmra.mxu0 %v280
        %v361 = vpop.f32.mrf.mxu0
        %v362 = vadd.f32 %v244, %v361
        %v363 = vpop.f32.mrf.mxu0
        %v364 = vadd.f32 %v244, %v363
        %365 = vmatmul.bf16.gmra.mxu0 %v281
        %v366 = vpop.f32.mrf.mxu0
        %v367 = vadd.f32 %v244, %v366
        %v368 = vpop.f32.mrf.mxu0
        %v369 = vadd.f32 %v244, %v368
        %370 = vmatmul.bf16.gmra.mxu0 %v282
        %v371 = vpop.f32.mrf.mxu0
        %v372 = vadd.f32 %v244, %v371
        %v373 = vpop.f32.mrf.mxu0
        %v374 = vadd.f32 %v244, %v373
        %375 = vmatmul.bf16.gmra.mxu0 %v283
        %v376 = vpop.f32.mrf.mxu0
        %v377 = vadd.f32 %v244, %v376
        %v378 = vpop.f32.mrf.mxu0
        %v379 = vadd.f32 %v244, %v378
        %380 = vmatmul.bf16.gmra.mxu0 %v284
        %v381 = vpop.f32.mrf.mxu0
        %v382 = vadd.f32 %v244, %v381
        %v383 = vpop.f32.mrf.mxu0
        %v384 = vadd.f32 %v244, %v383
        %385 = vmatmul.bf16.gmra.mxu0 %v285
        %v386 = vpop.f32.mrf.mxu0
        %v387 = vadd.f32 %v244, %v386
        %v388 = vpop.f32.mrf.mxu0
        %v389 = vadd.f32 %v244, %v388
        %390 = vdwg.mxu0
        %v391 = vmax.f32 %v352, 0.0
        %v392 = vmax.f32 %v354, 0.0
        %v393 = vmax.f32 %v357, 0.0
        %v394 = vmax.f32 %v359, 0.0
        %v395 = vmax.f32 %v362, 0.0
        %v396 = vmax.f32 %v364, 0.0
        %v397 = vmax.f32 %v367, 0.0
        %v398 = vmax.f32 %v369, 0.0
        %v399 = vmax.f32 %v372, 0.0
        %v400 = vmax.f32 %v374, 0.0
        %v401 = vmax.f32 %v377, 0.0
        %v402 = vmax.f32 %v379, 0.0
        %v403 = vmax.f32 %v382, 0.0
        %v404 = vmax.f32 %v384, 0.0
        %v405 = vmax.f32 %v387, 0.0
        %v406 = vmax.f32 %v389, 0.0
        %407 = vst [vmem:[%s207] sm:$0xff] %v391
        %408 = vst [vmem:[%s207 + $0x8] sm:$0xff] %v392
        %409 = vst [vmem:[%s207 + $0x10] sm:$0xff] %v393
        %410 = vst [vmem:[%s207 + $0x18] sm:$0xff] %v394
        %411 = vst [vmem:[%s207 + $0x20] sm:$0xff] %v395
        %412 = vst [vmem:[%s207 + $0x28] sm:$0xff] %v396
        %413 = vst [vmem:[%s207 + $0x30] sm:$0xff] %v397
        %414 = vst [vmem:[%s207 + $0x38] sm:$0xff] %v398
        %415 = vst [vmem:[%s207 + $0x40] sm:$0xff] %v399
        %416 = vst [vmem:[%s207 + $0x48] sm:$0xff] %v400
        %417 = vst [vmem:[%s207 + $0x50] sm:$0xff] %v401
        %418 = vst [vmem:[%s207 + $0x58] sm:$0xff] %v402
        %419 = vst [vmem:[%s207 + $0x60] sm:$0xff] %v403
        %420 = vst [vmem:[%s207 + $0x68] sm:$0xff] %v404
        %421 = vst [vmem:[%s207 + $0x70] sm:$0xff] %v405
        %422 = vst [vmem:[%s207 + $0x78] sm:$0xff] %v406
        %s423 = sand.u32 %s97, 1
        %s424 = scalar_lea.sflag [#allocation4], %s423
        %s425 = sand.u32 %s97, 1
        %s426 = smul.addr %s425, 128
        %s427 = scalar_lea.vmem [#allocation7], %s426
        // Predicated region
        $region41: #{tpu_custom_call.1} parent=31 // pred_check
          %p428 = pneg %p107
        $region42: #{tpu_custom_call.1} parent=31 // pred_check_branch
          %430 = sbr.rel (%p428) target = $region44
        $region43: #{tpu_custom_call.1} parent=31 // pred_region
          %s431 = smul.u32 16, %s21
          %433 = vsyncadd %s424, 0
          %s434 = smul.addr %s431, 8
          %s435 = scalar_lea.hbm %s3, %s434
          %s436 = sshll.u32 %s427, 4
          %s437 = int_to_ptr.vmem [resolvable:$true] %s436
          %s438 = sshll.u32 %s435, 4
          %s439 = int_to_ptr.hbm [resolvable:$true] %s438
          %444 = dma.vmem_to_hbm [thread:$0]  %s437, 2048, %s439, %s424, 128, 128, 8
        $region44: #{tpu_custom_call.1} parent=31 // pred_fallthru
          _
      $region32: #{tpu_custom_call.1} parent=5 // pred_fallthru
        _
      %p445 = scmp.le.s32.totalorder 2, %s16
      // Predicated region
      $region45: #{tpu_custom_call.1} parent=5 // pred_check
        %p446 = pneg %p445
      $region46: #{tpu_custom_call.1} parent=5 // pred_check_branch
        %448 = sbr.rel (%p446) target = $region48
      $region47: #{tpu_custom_call.1} parent=5 // pred_region
        %s449 = ssub.s32 %s16, 2
        // Predicated region
        $region49: #{tpu_custom_call.1} parent=47 // pred_check
          %p450 = pneg %p113
        $region50: #{tpu_custom_call.1} parent=47 // pred_check_branch
          %452 = sbr.rel (%p450) target = $region52
        $region51: #{tpu_custom_call.1} parent=47 // pred_region
          %s453 = sand.u32 %s98, 1
          %s454 = scalar_lea.sflag [#allocation4], %s453
          %s455 = sand.u32 %s98, 1
          %s456 = smul.addr %s455, 128
          %s457 = scalar_lea.vmem [#allocation7], %s456
          %459 = dma.done %s454, 2048
        $region52: #{tpu_custom_call.1} parent=47 // pred_fallthru
          _
      $region48: #{tpu_custom_call.1} parent=5 // pred_fallthru
        _
    $region6: #{tpu_custom_call.1} parent=1 // loop_footer
      %s20 = sadd.s32 1, %s16
    $region7: #{tpu_custom_call.1} parent=1 // loop_footer_branch
      %15 = sbr.rel target = $region3
    $region8: #{tpu_custom_call.1} parent=1 // loop_exit
      _
    %460 = vsyncpa [#allocation3], 1
    %s461 = scalar_lea.sflag [#allocation3], 1
    %462 = vsyncpa %s461, 1
    %463 = vsyncpa [#allocation6], 1
    %464 = vsyncpa [#allocation4], 1
    %s465 = scalar_lea.sflag [#allocation4], 1
    %466 = vsyncpa %s465, 1

</llo_original>
